<compile_context>
chip_gen: v5e
topology: v5e:2x2
jax: 0.10.0
libtpu: 0.0.40
codegen_flags: <defaults>
</compile_context>

<pallas_src>
from functools import partial

import jax
import jax.numpy as jnp
from jax.experimental import pallas as pl
from jax.experimental.pallas import tpu as pltpu


LANE = 128       # TPU lane width; H is padded to a multiple of this
_SUBLANE = 16    # batch-tile alignment (covers bf16 (16, 128) output packing)
_MAX_TB = 1024   # per-step batch tile cap (amortizes ~0.35 us/step overhead)


def _round_up(x, m):
    return (x + m - 1) // m * m


def qnet_kernel(x_ref, w_ref, b_ref, o_ref, *, state_dim):
    """One batch tile of the 4-layer MLP.

    x_ref: (TB, state_dim) f32   activations for this batch tile
    w_ref: (4, H, H)       bf16  zero-padded weight stack, (in, out) layout
    b_ref: (4, H)          f32   zero-padded bias stack
    o_ref: (TB, H)         bf16  lane-dense padded output (cols >= action_dim are 0)
    """
    x = x_ref[...]                                   # (TB, state_dim) f32
    b = b_ref[...]                                   # (4, H) f32, hoisted once

    # ---- fc1: K == state_dim.  Tiny K -> VPU broadcast FMAs, skip the MXU.
    if state_dim <= 8:
        h = x[:, 0:1] * w_ref[0, 0:1, :] + b[0:1, :]         # bf16*f32 -> f32
        for k in range(1, state_dim):                         # static unrolled loop
            h = h + x[:, k:k + 1] * w_ref[0, k:k + 1, :]
    else:
        # Larger state_dim: one MXU pass against the (state_dim, H) weight slab.
        h = jnp.dot(x.astype(jnp.bfloat16), w_ref[0, 0:state_dim, :],
                    preferred_element_type=jnp.float32) + b[0:1, :]
    h = jnp.maximum(h, 0.0)                          # relu(fc1(s)), f32

    # ---- fc2 / fc3 on the MXU: bf16 operands, f32 accumulation, f32 bias/ReLU.
    h = jnp.maximum(
        jnp.dot(h.astype(jnp.bfloat16), w_ref[1],
                preferred_element_type=jnp.float32) + b[1:2, :], 0.0)
    h = jnp.maximum(
        jnp.dot(h.astype(jnp.bfloat16), w_ref[2],
                preferred_element_type=jnp.float32) + b[2:3, :], 0.0)

    # ---- fc4, no activation.  Padded output columns stay exactly zero.
    q = jnp.dot(h.astype(jnp.bfloat16), w_ref[3],
                preferred_element_type=jnp.float32) + b[3:4, :]
    o_ref[...] = q.astype(o_ref.dtype)               # bf16 lane-dense store


def pack_params(params):
    """Zero-pad every layer to (H, H)/(H,), H a multiple of 128, and stack.

    Weights are stored bf16 (MXU-native); biases stay f32 (negligible bytes).
    """
    w1, w2, w3, w4 = params["w1"], params["w2"], params["w3"], params["w4"]
    b1, b2, b3, b4 = params["b1"], params["b2"], params["b3"], params["b4"]

    dims = [w1.shape[0], w1.shape[1], w2.shape[1], w3.shape[1], w4.shape[1]]
    H = _round_up(max(dims), LANE)

    def pad_w(w):
        wp = jnp.zeros((H, H), jnp.float32)
        wp = wp.at[: w.shape[0], : w.shape[1]].set(w.astype(jnp.float32))
        return wp.astype(jnp.bfloat16)

    def pad_b(b):
        b = b.reshape(-1).astype(jnp.float32)
        return jnp.zeros((H,), jnp.float32).at[: b.shape[0]].set(b)

    W = jnp.stack([pad_w(w1), pad_w(w2), pad_w(w3), pad_w(w4)])   # (4, H, H) bf16
    B = jnp.stack([pad_b(b1), pad_b(b2), pad_b(b3), pad_b(b4)])   # (4, H)    f32
    return W, B


def qnet_forward(s, W, B, *, action_dim):
    """s: (batch, state_dim) f32.  W: (4, H, H) bf16, B: (4, H) f32 packed params."""
    batch, state_dim = s.shape
    H = W.shape[-1]

    # Tile the batch: derive the tile from the actual batch (no fixed-512 padding
    # cliff), cap it at _MAX_TB, and use >= 2 grid steps whenever possible so the
    # "parallel" batch axis can be sharded across v7x's two TensorCores.
    batch_a = _round_up(batch, _SUBLANE)
    n_tiles = max(pl.cdiv(batch_a, _MAX_TB), 2 if batch_a > _SUBLANE else 1)
    tb = _round_up(pl.cdiv(batch_a, n_tiles), _SUBLANE)
    batch_pad = tb * pl.cdiv(batch_a, tb)
    if batch_pad != batch:
        s = jnp.pad(s, ((0, batch_pad - batch), (0, 0)))

    grid = (batch_pad // tb,)

    out = pl.pallas_call(
        partial(qnet_kernel, state_dim=state_dim),
        out_shape=jax.ShapeDtypeStruct((batch_pad, H), jnp.bfloat16),
        grid=grid,
        in_specs=[
            pl.BlockSpec((tb, state_dim), lambda i: (i, 0)),   # streamed activations
            pl.BlockSpec(W.shape, lambda i: (0, 0, 0)),        # VMEM-resident weights
            pl.BlockSpec(B.shape, lambda i: (0, 0)),           # VMEM-resident biases
        ],
        out_specs=pl.BlockSpec((tb, H), lambda i: (i, 0)),     # lane-dense bf16 store
        compiler_params=pltpu.CompilerParams(
            dimension_semantics=("parallel",)),                # megacore on v7x
    )(s, W, B)

    # TODO(synk): the padded-row / padded-column slice below is a small XLA copy;
    # fusing the greedy-action / max reduction in-kernel would remove it entirely.
    return out[:batch, :action_dim].astype(jnp.float32)


def init_params(key, state_dim, hidden_dim, action_dim):
    """Deterministic synthetic init (PyTorch-Linear-like uniform fan-in scaling)."""
    keys = jax.random.split(key, 8)

    def linear(kw, kb, fan_in, fan_out):
        bound = 1.0 / jnp.sqrt(jnp.float32(fan_in))
        w = jax.random.uniform(kw, (fan_in, fan_out), jnp.float32, -bound, bound)
        b = jax.random.uniform(kb, (1, fan_out), jnp.float32, -bound, bound)
        return w, b

    w1, b1 = linear(keys[0], keys[1], state_dim, hidden_dim)
    w2, b2 = linear(keys[2], keys[3], hidden_dim, hidden_dim)
    w3, b3 = linear(keys[4], keys[5], hidden_dim, hidden_dim)
    w4, b4 = linear(keys[6], keys[7], hidden_dim, action_dim)
    return {"w1": w1, "b1": b1, "w2": w2, "b2": b2,
            "w3": w3, "b3": b3, "w4": w4, "b4": b4}


def qnet_reference(s, p):
    h = jnp.maximum(s @ p["w1"] + p["b1"], 0.0)
    h = jnp.maximum(h @ p["w2"] + p["b2"], 0.0)
    h = jnp.maximum(h @ p["w3"] + p["b3"], 0.0)
    return h @ p["w4"] + p["b4"]


if __name__ == "__main__":
    # MountainCar sizes: state_dim=2, action_dim=3, small hidden, small batch.
    batch, state_dim, hidden_dim, action_dim = 8, 2, 32, 3

    key = jax.random.PRNGKey(0)
    k_in, k_params = jax.random.split(key)

    s = jax.random.normal(k_in, (batch, state_dim), jnp.float32)
    params = init_params(k_params, state_dim, hidden_dim, action_dim)
    W, B = pack_params(params)   # pack/pad/cast once, reuse every forward call

    fwd = jax.jit(qnet_forward, static_argnames=("action_dim",))
    out = fwd(s, W, B, action_dim=action_dim)
    out = jax.block_until_ready(out)

    ref = qnet_reference(s, params)
    assert out.shape == (batch, action_dim), out.shape
    # bf16 MXU operands / bf16 output store -> looser tolerance than pure f32.
    assert jnp.allclose(out, ref, atol=2e-2, rtol=2e-2), "mismatch vs JAX reference"

    print("KERNEL_OK")
</pallas_src>

<mosaic_0001>
module attributes {stable_mosaic.version = 11 : i64} {
  func.func @qnet_kernel(%arg0: i32, %arg1: memref<16x2xf32, #tpu.memory_space<vmem>>, %arg2: memref<4x128x128xbf16, #tpu.memory_space<vmem>>, %arg3: memref<4x128xf32, #tpu.memory_space<vmem>>, %arg4: memref<16x128xbf16, #tpu.memory_space<vmem>>) attributes {dimension_semantics = [#tpu.dimension_semantics<parallel>], iteration_bounds = array<i64: 1>, scalar_prefetch = 0 : i64, scratch_operands = 0 : i64, tpu.core_type = #tpu.core_type<tc>, window_params = [{transform_indices = @transform_0, window_bounds = array<i64: 16, 2>}, {pipeline_mode = #tpu.pipeline_mode<synchronous>, transform_indices = @transform_1, window_bounds = array<i64: 4, 128, 128>}, {pipeline_mode = #tpu.pipeline_mode<synchronous>, transform_indices = @transform_2, window_bounds = array<i64: 4, 128>}, {transform_indices = @transform_3, window_bounds = array<i64: 16, 128>}]} {
    %c0 = arith.constant 0 : index
    %c0_0 = arith.constant 0 : index
    %0 = vector.load %arg1[%c0, %c0_0] : memref<16x2xf32, #tpu.memory_space<vmem>>, vector<16x2xf32>
    %c0_1 = arith.constant 0 : index
    %c0_2 = arith.constant 0 : index
    %1 = vector.load %arg3[%c0_1, %c0_2] : memref<4x128xf32, #tpu.memory_space<vmem>>, vector<4x128xf32>
    %2 = vector.extract_strided_slice %0 {offsets = [0, 0], sizes = [16, 1], strides = [1, 1]} : vector<16x2xf32> to vector<16x1xf32>
    %c0_3 = arith.constant 0 : index
    %c0_4 = arith.constant 0 : index
    %c0_5 = arith.constant 0 : index
    %3 = vector.load %arg2[%c0_3, %c0_4, %c0_5] : memref<4x128x128xbf16, #tpu.memory_space<vmem>>, vector<1x1x128xbf16>
    %4 = vector.shape_cast %3 : vector<1x1x128xbf16> to vector<1x128xbf16>
    %5 = arith.extf %4 : vector<1x128xbf16> to vector<1x128xf32>
    %6 = vector.broadcast %2 : vector<16x1xf32> to vector<16x128xf32>
    %7 = vector.broadcast %5 : vector<1x128xf32> to vector<16x128xf32>
    %8 = arith.mulf %6, %7 : vector<16x128xf32>
    %9 = vector.extract_strided_slice %1 {offsets = [0, 0], sizes = [1, 128], strides = [1, 1]} : vector<4x128xf32> to vector<1x128xf32>
    %10 = vector.broadcast %9 : vector<1x128xf32> to vector<16x128xf32>
    %11 = arith.addf %8, %10 : vector<16x128xf32>
    %12 = vector.extract_strided_slice %0 {offsets = [0, 1], sizes = [16, 1], strides = [1, 1]} : vector<16x2xf32> to vector<16x1xf32>
    %c0_6 = arith.constant 0 : index
    %c1 = arith.constant 1 : index
    %c0_7 = arith.constant 0 : index
    %13 = vector.load %arg2[%c0_6, %c1, %c0_7] : memref<4x128x128xbf16, #tpu.memory_space<vmem>>, vector<1x1x128xbf16>
    %14 = vector.shape_cast %13 : vector<1x1x128xbf16> to vector<1x128xbf16>
    %15 = arith.extf %14 : vector<1x128xbf16> to vector<1x128xf32>
    %16 = vector.broadcast %12 : vector<16x1xf32> to vector<16x128xf32>
    %17 = vector.broadcast %15 : vector<1x128xf32> to vector<16x128xf32>
    %18 = arith.mulf %16, %17 : vector<16x128xf32>
    %19 = arith.addf %11, %18 : vector<16x128xf32>
    %cst = arith.constant 0.000000e+00 : f32
    %20 = vector.broadcast %cst : f32 to vector<16x128xf32>
    %21 = arith.maximumf %19, %20 : vector<16x128xf32>
    %22 = arith.truncf %21 : vector<16x128xf32> to vector<16x128xbf16>
    %c1_8 = arith.constant 1 : index
    %c0_9 = arith.constant 0 : index
    %c0_10 = arith.constant 0 : index
    %23 = vector.load %arg2[%c1_8, %c0_9, %c0_10] : memref<4x128x128xbf16, #tpu.memory_space<vmem>>, vector<1x128x128xbf16>
    %24 = vector.shape_cast %23 : vector<1x128x128xbf16> to vector<128x128xbf16>
    %cst_11 = arith.constant dense<0.000000e+00> : vector<16x128xf32>
    %25 = tpu.matmul %22, %24, %cst_11 {dimension_numbers = #tpu.dot_dimension_numbers<[1], [0], [0], [1], [0, 0, 1, 1], [], []>} : vector<16x128xbf16>, vector<128x128xbf16>, vector<16x128xf32> -> vector<16x128xf32>
    %26 = vector.extract_strided_slice %1 {offsets = [1, 0], sizes = [1, 128], strides = [1, 1]} : vector<4x128xf32> to vector<1x128xf32>
    %27 = vector.broadcast %26 : vector<1x128xf32> to vector<16x128xf32>
    %28 = arith.addf %25, %27 : vector<16x128xf32>
    %cst_12 = arith.constant 0.000000e+00 : f32
    %29 = vector.broadcast %cst_12 : f32 to vector<16x128xf32>
    %30 = arith.maximumf %28, %29 : vector<16x128xf32>
    %31 = arith.truncf %30 : vector<16x128xf32> to vector<16x128xbf16>
    %c2 = arith.constant 2 : index
    %c0_13 = arith.constant 0 : index
    %c0_14 = arith.constant 0 : index
    %32 = vector.load %arg2[%c2, %c0_13, %c0_14] : memref<4x128x128xbf16, #tpu.memory_space<vmem>>, vector<1x128x128xbf16>
    %33 = vector.shape_cast %32 : vector<1x128x128xbf16> to vector<128x128xbf16>
    %cst_15 = arith.constant dense<0.000000e+00> : vector<16x128xf32>
    %34 = tpu.matmul %31, %33, %cst_15 {dimension_numbers = #tpu.dot_dimension_numbers<[1], [0], [0], [1], [0, 0, 1, 1], [], []>} : vector<16x128xbf16>, vector<128x128xbf16>, vector<16x128xf32> -> vector<16x128xf32>
    %35 = vector.extract_strided_slice %1 {offsets = [2, 0], sizes = [1, 128], strides = [1, 1]} : vector<4x128xf32> to vector<1x128xf32>
    %36 = vector.broadcast %35 : vector<1x128xf32> to vector<16x128xf32>
    %37 = arith.addf %34, %36 : vector<16x128xf32>
    %cst_16 = arith.constant 0.000000e+00 : f32
    %38 = vector.broadcast %cst_16 : f32 to vector<16x128xf32>
    %39 = arith.maximumf %37, %38 : vector<16x128xf32>
    %40 = arith.truncf %39 : vector<16x128xf32> to vector<16x128xbf16>
    %c3 = arith.constant 3 : index
    %c0_17 = arith.constant 0 : index
    %c0_18 = arith.constant 0 : index
    %41 = vector.load %arg2[%c3, %c0_17, %c0_18] : memref<4x128x128xbf16, #tpu.memory_space<vmem>>, vector<1x128x128xbf16>
    %42 = vector.shape_cast %41 : vector<1x128x128xbf16> to vector<128x128xbf16>
    %cst_19 = arith.constant dense<0.000000e+00> : vector<16x128xf32>
    %43 = tpu.matmul %40, %42, %cst_19 {dimension_numbers = #tpu.dot_dimension_numbers<[1], [0], [0], [1], [0, 0, 1, 1], [], []>} : vector<16x128xbf16>, vector<128x128xbf16>, vector<16x128xf32> -> vector<16x128xf32>
    %44 = vector.extract_strided_slice %1 {offsets = [3, 0], sizes = [1, 128], strides = [1, 1]} : vector<4x128xf32> to vector<1x128xf32>
    %45 = vector.broadcast %44 : vector<1x128xf32> to vector<16x128xf32>
    %46 = arith.addf %43, %45 : vector<16x128xf32>
    %47 = arith.truncf %46 : vector<16x128xf32> to vector<16x128xbf16>
    %c0_20 = arith.constant 0 : index
    %c0_21 = arith.constant 0 : index
    %48 = vector.load %arg4[%c0_20, %c0_21] : memref<16x128xbf16, #tpu.memory_space<vmem>>, vector<16x128xbf16>
    tpu.vector_store %arg4[%c0_20, %c0_21], %47 {strides = array<i32>} : memref<16x128xbf16, #tpu.memory_space<vmem>>, vector<16x128xbf16>,
    return
  }
  func.func @transform_0(%arg0: i32) -> (i32, i32) {
    %c0_i32 = arith.constant 0 : i32
    %c0_i32_0 = arith.constant 0 : i32
    return %arg0, %c0_i32 : i32, i32
  }
  func.func @transform_1(%arg0: i32) -> (i32, i32, i32) {
    %c0_i32 = arith.constant 0 : i32
    %c0_i32_0 = arith.constant 0 : i32
    %c0_i32_1 = arith.constant 0 : i32
    %c0_i32_2 = arith.constant 0 : i32
    return %c0_i32, %c0_i32_0, %c0_i32_1 : i32, i32, i32
  }
  func.func @transform_2(%arg0: i32) -> (i32, i32) {
    %c0_i32 = arith.constant 0 : i32
    %c0_i32_0 = arith.constant 0 : i32
    %c0_i32_1 = arith.constant 0 : i32
    return %c0_i32, %c0_i32_0 : i32, i32
  }
  func.func @transform_3(%arg0: i32) -> (i32, i32) {
    %c0_i32 = arith.constant 0 : i32
    %c0_i32_0 = arith.constant 0 : i32
    return %arg0, %c0_i32 : i32, i32
  }
}

</mosaic_0001>

<llo_original>
// kernel: qnet_forward.1
$region0: #{qnet_forward.1}
  #allocation0 [shape = 'u32[]', space=smem, size = 0x4, offset = 0x4, fixed_abs, tag = 'smem constant byte address 0x4 - core index']
  #allocation1 [shape = 'u32[72,128]{1,0:T(1,128)}', space=vmem, size = 0x9000, scoped, tag = 'internal scratch']
  %s0 = inlined_call_operand.vmem [shape: f32[16,2], index: 0, kind: input, shape index: {}]
  %s1 = inlined_call_operand.hbm [shape: bf16[4,128,128], index: 1, kind: input, shape index: {}]
  %s2 = inlined_call_operand.vmem [shape: f32[4,128], index: 2, kind: input, shape index: {}]
  %s3 = inlined_call_operand.vmem [shape: bf16[16,128], index: 3, kind: output, shape index: {}]
  %s4 = sld [smem:[#allocation0]]
  $region26: #{qnet_forward.1} parent=0
    _
  %s6 = ssub.s32 1, %s4
  %s7 = scalar_select 0, %s6, %s4
  $region1: #{qnet_forward.1} parent=0
    #allocation2 [shape = 'u8[131072]{0}', space=vmem, size = 0x20000, scoped, tag = 'input window, operand 1, single buffered']
    #allocation3 [shape = 's32[1]{0}', space=sflag, size = 0x4, scoped, tag = 'scoped memory for qnet_forward.1']
    %8 = vsyncpa [#allocation3], 0
    // Predicated region
    $region2: #{qnet_forward.1} parent=1 // pred_check
      _
    $region3: #{qnet_forward.1} parent=1 // pred_check_branch
      %10 = sbr.rel (0) target = $region5
    $region4: #{qnet_forward.1} parent=1 // pred_region
      _
    $region5: #{qnet_forward.1} parent=1 // pred_fallthru
      _
    // Predicated region
    $region6: #{qnet_forward.1} parent=1 // pred_check
      _
    $region7: #{qnet_forward.1} parent=1 // pred_check_branch
      %12 = sbr.rel (0) target = $region9
    $region8: #{qnet_forward.1} parent=1 // pred_region
      %14 = vsyncadd [#allocation3], 0
      %s15 = sshll.u32 %s1, 4
      %s16 = int_to_ptr.hbm [resolvable:$true] %s15
      %s17 = sshll.u32 [#allocation2], 4
      %s18 = int_to_ptr.vmem [resolvable:$true] %s17
      %23 = dma.hbm_to_vmem [thread:$0]  %s16, 4096, %s18, [#allocation3], 64, 64, 4
    $region9: #{qnet_forward.1} parent=1 // pred_fallthru
      _
    // Predicated region
    $region10: #{qnet_forward.1} parent=1 // pred_check
      _
    $region11: #{qnet_forward.1} parent=1 // pred_check_branch
      %25 = sbr.rel (0) target = $region13
    $region12: #{qnet_forward.1} parent=1 // pred_region
      _
    $region13: #{qnet_forward.1} parent=1 // pred_fallthru
      _
    // Predicated region
    $region14: #{qnet_forward.1} parent=1 // pred_check
      _
    $region15: #{qnet_forward.1} parent=1 // pred_check_branch
      %27 = sbr.rel (0) target = $region17
    $region16: #{qnet_forward.1} parent=1 // pred_region
      %29 = dma.done [#allocation3], 4096
    $region17: #{qnet_forward.1} parent=1 // pred_fallthru
      _
    %v30 = vld [vmem:[%s0] sm:$0xff]
    %v31 = vld [vmem:[%s0 + $0x8] sm:$0xff]
    %v32 = vld [vmem:[%s2] sm:$0xf]
    %v33 = vld [vmem:[#allocation2] sm:$0x1]
    %v34 = vunpack.c.l.bf16 %v33
    %36 = vset.pattern.permute.xlu0 0
    %37 = vperm.xlu0 %36, %v30
    %v38 = vpop.permute.xlu0 %37
    %41 = vset.pattern.permute.xlu0 0
    %42 = vperm.xlu0 %41, %v31
    %v43 = vpop.permute.xlu0 %42
    %v45 = vperm.slane %v34, 0
    %v46 = vmul.f32 %v38, %v45
    %v47 = vmul.f32 %v43, %v45
    %v48 = vperm.slane %v32, 0
    %v49 = vadd.f32 %v46, %v48
    %v50 = vadd.f32 %v47, %v48
    %51 = vset.pattern.permute.xlu0 1
    %52 = vperm.xlu0 %51, %v30
    %v53 = vpop.permute.xlu0 %52
    %55 = vset.pattern.permute.xlu0 1
    %56 = vperm.xlu0 %55, %v31
    %v57 = vpop.permute.xlu0 %56
    %v59 = vperm.slane %v34, 1
    %v60 = vmul.f32 %v53, %v59
    %v61 = vmul.f32 %v57, %v59
    %v62 = vadd.f32 %v49, %v60
    %v63 = vadd.f32 %v50, %v61
    %v64 = vmax.f32 %v62, 0.0
    %v65 = vmax.f32 %v63, 0.0
    %v66 = vpack.c.bf16 %v65, %v64
    %s67 = scalar_lea.vmem [#allocation2], 64
    %v68 = vld [vmem:[%s67] sm:$0xf]
    %v69 = vld [vmem:[%s67 + $0x4] sm:$0xf]
    %v70 = vld [vmem:[%s67 + $0x8] sm:$0xf]
    %v71 = vld [vmem:[%s67 + $0xc] sm:$0xf]
    %v72 = vld [vmem:[%s67 + $0x10] sm:$0xf]
    %v73 = vld [vmem:[%s67 + $0x14] sm:$0xf]
    %v74 = vld [vmem:[%s67 + $0x18] sm:$0xf]
    %v75 = vld [vmem:[%s67 + $0x1c] sm:$0xf]
    %v76 = vld [vmem:[%s67 + $0x20] sm:$0xf]
    %v77 = vld [vmem:[%s67 + $0x24] sm:$0xf]
    %v78 = vld [vmem:[%s67 + $0x28] sm:$0xf]
    %v79 = vld [vmem:[%s67 + $0x2c] sm:$0xf]
    %v80 = vld [vmem:[%s67 + $0x30] sm:$0xf]
    %v81 = vld [vmem:[%s67 + $0x34] sm:$0xf]
    %v82 = vld [vmem:[%s67 + $0x38] sm:$0xf]
    %v83 = vld [vmem:[%s67 + $0x3c] sm:$0xf]
    %v84 = vperm.slane %v32, 1
    %v101 = vunpack.c.l.b16 %v68
    %v102 = vunpack.c.l.b16 %v69
    %v103 = vunpack.c.l.b16 %v70
    %v104 = vunpack.c.l.b16 %v71
    %v105 = vunpack.c.l.b16 %v72
    %v106 = vunpack.c.l.b16 %v73
    %v107 = vunpack.c.l.b16 %v74
    %v108 = vunpack.c.l.b16 %v75
    %v109 = vunpack.c.l.b16 %v76
    %v110 = vunpack.c.l.b16 %v77
    %v111 = vunpack.c.l.b16 %v78
    %v112 = vunpack.c.l.b16 %v79
    %v113 = vunpack.c.l.b16 %v80
    %v114 = vunpack.c.l.b16 %v81
    %v115 = vunpack.c.l.b16 %v82
    %v116 = vunpack.c.l.b16 %v83
    %v117 = vpack.c.b16 %v102, %v101
    %v118 = vpack.c.b16 %v104, %v103
    %v119 = vpack.c.b16 %v106, %v105
    %v120 = vpack.c.b16 %v108, %v107
    %v121 = vpack.c.b16 %v110, %v109
    %v122 = vpack.c.b16 %v112, %v111
    %v123 = vpack.c.b16 %v114, %v113
    %v124 = vpack.c.b16 %v116, %v115
    %133 = vmatpush.bf16.msra.mxu0 %v124
    %134 = vmatpush.bf16.msra.mxu0 %v123
    %135 = vmatpush.bf16.msra.mxu0 %v122
    %136 = vmatpush.bf16.msra.mxu0 %v121
    %137 = vmatpush.bf16.msra.mxu0 %v120
    %138 = vmatpush.bf16.msra.mxu0 %v119
    %139 = vmatpush.bf16.msra.mxu0 %v118
    %140 = vmatpush.bf16.msra.mxu0 %v117
    %141 = vmatmul.bf16.gmra.mxu0 %v66
    %v142 = vpop.f32.mrf.mxu0
    %v143 = vadd.f32 %v84, %v142
    %v144 = vpop.f32.mrf.mxu0
    %v145 = vadd.f32 %v84, %v144
    %146 = vdwg.mxu0
    %v147 = vmax.f32 %v143, 0.0
    %v148 = vmax.f32 %v145, 0.0
    %v149 = vpack.c.bf16 %v148, %v147
    %s150 = scalar_lea.vmem [#allocation2], 128
    %v151 = vld [vmem:[%s150] sm:$0xf]
    %v152 = vld [vmem:[%s150 + $0x4] sm:$0xf]
    %v153 = vld [vmem:[%s150 + $0x8] sm:$0xf]
    %v154 = vld [vmem:[%s150 + $0xc] sm:$0xf]
    %v155 = vld [vmem:[%s150 + $0x10] sm:$0xf]
    %v156 = vld [vmem:[%s150 + $0x14] sm:$0xf]
    %v157 = vld [vmem:[%s150 + $0x18] sm:$0xf]
    %v158 = vld [vmem:[%s150 + $0x1c] sm:$0xf]
    %v159 = vld [vmem:[%s150 + $0x20] sm:$0xf]
    %v160 = vld [vmem:[%s150 + $0x24] sm:$0xf]
    %v161 = vld [vmem:[%s150 + $0x28] sm:$0xf]
    %v162 = vld [vmem:[%s150 + $0x2c] sm:$0xf]
    %v163 = vld [vmem:[%s150 + $0x30] sm:$0xf]
    %v164 = vld [vmem:[%s150 + $0x34] sm:$0xf]
    %v165 = vld [vmem:[%s150 + $0x38] sm:$0xf]
    %v166 = vld [vmem:[%s150 + $0x3c] sm:$0xf]
    %v167 = vperm.slane %v32, 2
    %v184 = vunpack.c.l.b16 %v151
    %v185 = vunpack.c.l.b16 %v152
    %v186 = vunpack.c.l.b16 %v153
    %v187 = vunpack.c.l.b16 %v154
    %v188 = vunpack.c.l.b16 %v155
    %v189 = vunpack.c.l.b16 %v156
    %v190 = vunpack.c.l.b16 %v157
    %v191 = vunpack.c.l.b16 %v158
    %v192 = vunpack.c.l.b16 %v159
    %v193 = vunpack.c.l.b16 %v160
    %v194 = vunpack.c.l.b16 %v161
    %v195 = vunpack.c.l.b16 %v162
    %v196 = vunpack.c.l.b16 %v163
    %v197 = vunpack.c.l.b16 %v164
    %v198 = vunpack.c.l.b16 %v165
    %v199 = vunpack.c.l.b16 %v166
    %v200 = vpack.c.b16 %v185, %v184
    %v201 = vpack.c.b16 %v187, %v186
    %v202 = vpack.c.b16 %v189, %v188
    %v203 = vpack.c.b16 %v191, %v190
    %v204 = vpack.c.b16 %v193, %v192
    %v205 = vpack.c.b16 %v195, %v194
    %v206 = vpack.c.b16 %v197, %v196
    %v207 = vpack.c.b16 %v199, %v198
    %216 = vmatpush.bf16.msra.mxu0 %v207
    %217 = vmatpush.bf16.msra.mxu0 %v206
    %218 = vmatpush.bf16.msra.mxu0 %v205
    %219 = vmatpush.bf16.msra.mxu0 %v204
    %220 = vmatpush.bf16.msra.mxu0 %v203
    %221 = vmatpush.bf16.msra.mxu0 %v202
    %222 = vmatpush.bf16.msra.mxu0 %v201
    %223 = vmatpush.bf16.msra.mxu0 %v200
    %224 = vmatmul.bf16.gmra.mxu0 %v149
    %v225 = vpop.f32.mrf.mxu0
    %v226 = vadd.f32 %v167, %v225
    %v227 = vpop.f32.mrf.mxu0
    %v228 = vadd.f32 %v167, %v227
    %229 = vdwg.mxu0
    %v230 = vmax.f32 %v226, 0.0
    %v231 = vmax.f32 %v228, 0.0
    %v232 = vpack.c.bf16 %v231, %v230
    %s233 = scalar_lea.vmem [#allocation2], 192
    %v234 = vld [vmem:[%s233] sm:$0xf]
    %v235 = vld [vmem:[%s233 + $0x4] sm:$0xf]
    %v236 = vld [vmem:[%s233 + $0x8] sm:$0xf]
    %v237 = vld [vmem:[%s233 + $0xc] sm:$0xf]
    %v238 = vld [vmem:[%s233 + $0x10] sm:$0xf]
    %v239 = vld [vmem:[%s233 + $0x14] sm:$0xf]
    %v240 = vld [vmem:[%s233 + $0x18] sm:$0xf]
    %v241 = vld [vmem:[%s233 + $0x1c] sm:$0xf]
    %v242 = vld [vmem:[%s233 + $0x20] sm:$0xf]
    %v243 = vld [vmem:[%s233 + $0x24] sm:$0xf]
    %v244 = vld [vmem:[%s233 + $0x28] sm:$0xf]
    %v245 = vld [vmem:[%s233 + $0x2c] sm:$0xf]
    %v246 = vld [vmem:[%s233 + $0x30] sm:$0xf]
    %v247 = vld [vmem:[%s233 + $0x34] sm:$0xf]
    %v248 = vld [vmem:[%s233 + $0x38] sm:$0xf]
    %v249 = vld [vmem:[%s233 + $0x3c] sm:$0xf]
    %v250 = vperm.slane %v32, 3
    %v267 = vunpack.c.l.b16 %v234
    %v268 = vunpack.c.l.b16 %v235
    %v269 = vunpack.c.l.b16 %v236
    %v270 = vunpack.c.l.b16 %v237
    %v271 = vunpack.c.l.b16 %v238
    %v272 = vunpack.c.l.b16 %v239
    %v273 = vunpack.c.l.b16 %v240
    %v274 = vunpack.c.l.b16 %v241
    %v275 = vunpack.c.l.b16 %v242
    %v276 = vunpack.c.l.b16 %v243
    %v277 = vunpack.c.l.b16 %v244
    %v278 = vunpack.c.l.b16 %v245
    %v279 = vunpack.c.l.b16 %v246
    %v280 = vunpack.c.l.b16 %v247
    %v281 = vunpack.c.l.b16 %v248
    %v282 = vunpack.c.l.b16 %v249
    %v283 = vpack.c.b16 %v268, %v267
    %v284 = vpack.c.b16 %v270, %v269
    %v285 = vpack.c.b16 %v272, %v271
    %v286 = vpack.c.b16 %v274, %v273
    %v287 = vpack.c.b16 %v276, %v275
    %v288 = vpack.c.b16 %v278, %v277
    %v289 = vpack.c.b16 %v280, %v279
    %v290 = vpack.c.b16 %v282, %v281
    %299 = vmatpush.bf16.msra.mxu0 %v290
    %300 = vmatpush.bf16.msra.mxu0 %v289
    %301 = vmatpush.bf16.msra.mxu0 %v288
    %302 = vmatpush.bf16.msra.mxu0 %v287
    %303 = vmatpush.bf16.msra.mxu0 %v286
    %304 = vmatpush.bf16.msra.mxu0 %v285
    %305 = vmatpush.bf16.msra.mxu0 %v284
    %306 = vmatpush.bf16.msra.mxu0 %v283
    %307 = vmatmul.bf16.gmra.mxu0 %v232
    %v308 = vpop.f32.mrf.mxu0
    %v309 = vadd.f32 %v250, %v308
    %v310 = vpop.f32.mrf.mxu0
    %v311 = vadd.f32 %v250, %v310
    %312 = vdwg.mxu0
    %v313 = vpack.c.bf16 %v309, %v309
    %v314 = vpack.c.bf16 %v311, %v311
    %315 = vst [vmem:[%s3] sm:$0xf] %v313
    %316 = vst [vmem:[%s3 + $0x4] sm:$0xf] %v314
    // Predicated region
    $region18: #{qnet_forward.1} parent=1 // pred_check
      _
    $region19: #{qnet_forward.1} parent=1 // pred_check_branch
      %318 = sbr.rel (0) target = $region21
    $region20: #{qnet_forward.1} parent=1 // pred_region
      _
    $region21: #{qnet_forward.1} parent=1 // pred_fallthru
      _
    // Predicated region
    $region22: #{qnet_forward.1} parent=1 // pred_check
      _
    $region23: #{qnet_forward.1} parent=1 // pred_check_branch
      %320 = sbr.rel (0) target = $region25
    $region24: #{qnet_forward.1} parent=1 // pred_region
      _
    $region25: #{qnet_forward.1} parent=1 // pred_fallthru
      _
    %321 = vsyncpa [#allocation3], 1

</llo_original>
